<compile_context>
chip_gen: v7x
topology: tpu7x:2x2x1
jax: 0.10.0
libtpu: 0.0.40
codegen_flags: <defaults>
</compile_context>

<pallas_src>
import functools

import jax
import jax.numpy as jnp
from jax.experimental import pallas as pl
from jax.experimental.pallas import tpu as pltpu


# ----------------------------------------------------------------------------
# Kernel: gates = x@Wx (+ recurrent matmuls) + b, then LSTM2Cell gating.
# has_prev / has_delayed are compile-time Python flags; the variadic ref list
# only contains operands actually read by that specialization.
# ----------------------------------------------------------------------------
def _lstm2cell_kernel(*refs, state_size, has_prev, has_delayed, param_dtype):
    refs = list(refs)
    out_ref = refs.pop()                       # (bb, 2*state_size) output slab
    it = iter(refs)
    x_ref, wx_ref, b_ref = next(it), next(it), next(it)

    # MXU matmuls with f32 accumulation.
    acc = jnp.dot(x_ref[...].astype(param_dtype), wx_ref[...],
                  preferred_element_type=jnp.float32)
    if has_delayed:
        hp_ref, hd_ref = next(it), next(it)
        wh1_ref, wh2_ref = next(it), next(it)
        acc = acc + jnp.dot(hp_ref[...].astype(param_dtype), wh1_ref[...],
                            preferred_element_type=jnp.float32)
        acc = acc + jnp.dot(hd_ref[...].astype(param_dtype), wh2_ref[...],
                            preferred_element_type=jnp.float32)
    elif has_prev:
        # delayedH == prevH in the module, so (Wh1 + Wh2) is pre-folded and we
        # do a single recurrent matmul.
        hp_ref, whs_ref = next(it), next(it)
        acc = acc + jnp.dot(hp_ref[...].astype(param_dtype), whs_ref[...],
                            preferred_element_type=jnp.float32)

    gates = acc + b_ref[...]                   # f32 bias; "+1" already folded in

    s = state_size
    # One EUP launch for the three sigmoid gates (contiguous 3*s lanes),
    # one tanh for the candidate state.
    sig = jax.nn.sigmoid(gates[:, :3 * s])
    forget_gate = sig[:, 0 * s:1 * s]          # sigmoid(chunk0 + 1)
    ingate      = sig[:, 1 * s:2 * s]
    out_gate    = sig[:, 2 * s:3 * s]
    new_state   = jnp.tanh(gates[:, 3 * s:4 * s])
    if has_prev:
        c_ref = next(it)
        new_state = forget_gate * c_ref[...] + ingate * new_state
    whole = out_gate * jnp.tanh(new_state)

    # Single lane-dense, full-width (128-lane for state_size=64) store.
    out_ref[...] = jnp.concatenate([whole, new_state], axis=-1)


def _pick_batch_tile(B):
    """Batch-tile heuristic.

    Single-TC chips (v5e/v6e): one big tile amortizes the ~0.35 us per-grid-step
    overhead best, so keep a single full-batch block up to 512 rows.  For large
    batches split into >= 2 even tiles (multiples of 8) so v7x's two
    TensorCores can each take a share via dimension_semantics=("parallel",).
    """
    if B <= 512 or B % 16 != 0:
        return B
    ntiles = 2
    while B // ntiles > 1024 and B % (ntiles * 2) == 0:
        ntiles *= 2
    bb = B // ntiles
    return bb if bb % 8 == 0 else B


# ----------------------------------------------------------------------------
# Python wrapper mirroring LSTM2Cell (parameter creation + forward glue).
# ----------------------------------------------------------------------------
class LSTM2CellPallas:
    def __init__(self, input_size, h_size, state_size, key,
                 param_dtype=jnp.bfloat16):
        self.input_size = input_size
        self.h_size = h_size
        self.state_size = state_size
        self.out_size = state_size - h_size
        self.param_dtype = param_dtype

        in_features = input_size + 2 * h_size
        out_features = 4 * state_size
        k_w, k_b = jax.random.split(key)
        bound = 1.0 / (in_features ** 0.5)     # torch.nn.Linear-style uniform init
        w_full = jax.random.uniform(k_w, (in_features, out_features),
                                    jnp.float32, -bound, bound)
        b = jax.random.uniform(k_b, (1, out_features), jnp.float32, -bound, bound)
        # Fold the forget-gate "+1" into the stored bias.
        self.b = b.at[:, :state_size].add(1.0)            # bias kept in f32
        # Split the Linear weight by input row block (x | prevH | delayedH) so
        # the kernel never needs a concatenated xh.
        w_x_f32 = w_full[:input_size]
        w_hp_f32 = w_full[input_size:input_size + h_size]
        w_hd_f32 = w_full[input_size + h_size:]
        self.w_x = w_x_f32.astype(param_dtype)
        self.w_hp = w_hp_f32.astype(param_dtype)
        self.w_hd = w_hd_f32.astype(param_dtype)
        # Folded recurrent weight for the delayedH == prevH specialization
        # (summed in f32, then cast once).
        self.w_h_sum = (w_hp_f32 + w_hd_f32).astype(param_dtype)

    def forward(self, input_t, hasDelayedState: bool, hasPrevState: bool,
                prevHState=None, delayedHstate=None, cstate=None):
        B = input_t.shape[0]
        S = self.state_size

        bb = _pick_batch_tile(B)
        grid = (B // bb,)

        def row_spec(cols):                    # batch-tiled operand
            return pl.BlockSpec((bb, cols), lambda i: (i, 0))

        def resident_spec(shape):              # weights/bias: same block every step
            return pl.BlockSpec(shape, lambda i: (0, 0))

        args = [input_t, self.w_x, self.b]
        in_specs = [row_spec(self.input_size),
                    resident_spec(self.w_x.shape),
                    resident_spec(self.b.shape)]
        if hasDelayedState:
            # Matches torch: uses prevHState AND delayedHstate regardless of
            # hasPrevState (hasPrevState only gates the cstate mixing).
            args += [prevHState, delayedHstate, self.w_hp, self.w_hd]
            in_specs += [row_spec(self.h_size), row_spec(self.h_size),
                         resident_spec(self.w_hp.shape),
                         resident_spec(self.w_hd.shape)]
        elif hasPrevState:
            args += [prevHState, self.w_h_sum]
            in_specs += [row_spec(self.h_size),
                         resident_spec(self.w_h_sum.shape)]
        if hasPrevState:
            args.append(cstate)
            in_specs.append(row_spec(S))

        kernel = functools.partial(_lstm2cell_kernel,
                                   state_size=S,
                                   has_prev=hasPrevState,
                                   has_delayed=hasDelayedState,
                                   param_dtype=self.param_dtype)

        slab = pl.pallas_call(
            kernel,
            grid=grid,
            in_specs=in_specs,
            out_specs=pl.BlockSpec((bb, 2 * S), lambda i: (i, 0)),
            out_shape=jax.ShapeDtypeStruct((B, 2 * S), jnp.float32),
            compiler_params=pltpu.CompilerParams(
                dimension_semantics=("parallel",),
                vmem_limit_bytes=32 * 1024 * 1024),
        )(*args)

        whole = slab[:, :S]
        new_state = slab[:, S:]
        output_t = whole[:, :self.out_size]
        h_state = whole[:, self.out_size:]
        return output_t, (h_state, new_state)


# ----------------------------------------------------------------------------
# Pure-JAX reference using the same stored parameters (bf16 weights, folded
# bias, folded w_h_sum for the prev-only case), mirroring LSTM2Cell.forward.
# The block-factored matmul is mathematically identical to cat([...]) @ W.
# ----------------------------------------------------------------------------
def _ref_forward(cell, input_t, hasDelayedState, hasPrevState,
                 prevHState=None, delayedHstate=None, cstate=None):
    pd = cell.param_dtype
    gates = jnp.dot(input_t.astype(pd), cell.w_x,
                    preferred_element_type=jnp.float32)
    if hasDelayedState:
        gates = gates + jnp.dot(prevHState.astype(pd), cell.w_hp,
                                preferred_element_type=jnp.float32)
        gates = gates + jnp.dot(delayedHstate.astype(pd), cell.w_hd,
                                preferred_element_type=jnp.float32)
    elif hasPrevState:
        gates = gates + jnp.dot(prevHState.astype(pd), cell.w_h_sum,
                                preferred_element_type=jnp.float32)
    gates = gates + cell.b
    s = cell.state_size
    forget = jax.nn.sigmoid(gates[:, 0 * s:1 * s])   # "+1" folded into cell.b
    ingate = jax.nn.sigmoid(gates[:, 1 * s:2 * s])
    out_gate = jax.nn.sigmoid(gates[:, 2 * s:3 * s])
    new_state = jnp.tanh(gates[:, 3 * s:4 * s])
    if hasPrevState:
        new_state = forget * cstate + ingate * new_state
    whole = out_gate * jnp.tanh(new_state)
    return whole[:, :cell.out_size], (whole[:, cell.out_size:], new_state)


if __name__ == "__main__":
    key = jax.random.PRNGKey(0)
    k_cell, k_x, k_ph, k_dh, k_c = jax.random.split(key, 5)

    B = 8
    input_size = 16
    h_size = 32
    state_size = 64        # out_size = 32

    cell = LSTM2CellPallas(input_size, h_size, state_size, k_cell)

    x = jax.random.normal(k_x, (B, input_size), jnp.float32)
    prev_h = jax.random.normal(k_ph, (B, h_size), jnp.float32)
    del_h = jax.random.normal(k_dh, (B, h_size), jnp.float32)
    c = jax.random.normal(k_c, (B, state_size), jnp.float32)

    cases = [
        dict(hasDelayedState=True, hasPrevState=True,
             prevHState=prev_h, delayedHstate=del_h, cstate=c),
        dict(hasDelayedState=True, hasPrevState=False,
             prevHState=prev_h, delayedHstate=del_h),
        dict(hasDelayedState=False, hasPrevState=True,
             prevHState=prev_h, cstate=c),
        dict(hasDelayedState=False, hasPrevState=False),
    ]

    ok = True
    for kwargs in cases:
        out_t, (h_s, new_c) = cell.forward(x, **kwargs)
        jax.block_until_ready((out_t, h_s, new_c))
        r_out, (r_h, r_c) = _ref_forward(cell, x, **kwargs)
        for got, want in ((out_t, r_out), (h_s, r_h), (new_c, r_c)):
            if not jnp.allclose(got, want, atol=1e-4, rtol=1e-4):
                ok = False

    print("KERNEL_OK" if ok else "KERNEL_MISMATCH")
</pallas_src>

<mosaic_0001>
module attributes {stable_mosaic.version = 11 : i64} {
  func.func @_lstm2cell_kernel(%arg0: i32, %arg1: memref<8x16xf32, #tpu.memory_space<vmem>>, %arg2: memref<16x256xbf16, #tpu.memory_space<vmem>>, %arg3: memref<1x256xf32, #tpu.memory_space<vmem>>, %arg4: memref<8x32xf32, #tpu.memory_space<vmem>>, %arg5: memref<8x32xf32, #tpu.memory_space<vmem>>, %arg6: memref<32x256xbf16, #tpu.memory_space<vmem>>, %arg7: memref<32x256xbf16, #tpu.memory_space<vmem>>, %arg8: memref<8x64xf32, #tpu.memory_space<vmem>>, %arg9: memref<8x128xf32, #tpu.memory_space<vmem>>) attributes {dimension_semantics = [#tpu.dimension_semantics<parallel>], iteration_bounds = array<i64: 1>, scalar_prefetch = 0 : i64, scratch_operands = 0 : i64, tpu.core_type = #tpu.core_type<tc>, window_params = [{transform_indices = @transform_0, window_bounds = array<i64: 8, 16>}, {pipeline_mode = #tpu.pipeline_mode<synchronous>, transform_indices = @transform_1, window_bounds = array<i64: 16, 256>}, {pipeline_mode = #tpu.pipeline_mode<synchronous>, transform_indices = @transform_2, window_bounds = array<i64: 1, 256>}, {transform_indices = @transform_3, window_bounds = array<i64: 8, 32>}, {transform_indices = @transform_4, window_bounds = array<i64: 8, 32>}, {pipeline_mode = #tpu.pipeline_mode<synchronous>, transform_indices = @transform_5, window_bounds = array<i64: 32, 256>}, {pipeline_mode = #tpu.pipeline_mode<synchronous>, transform_indices = @transform_6, window_bounds = array<i64: 32, 256>}, {transform_indices = @transform_7, window_bounds = array<i64: 8, 64>}, {transform_indices = @transform_8, window_bounds = array<i64: 8, 128>}]} {
    %c0 = arith.constant 0 : index
    %c0_0 = arith.constant 0 : index
    %0 = vector.load %arg1[%c0, %c0_0] : memref<8x16xf32, #tpu.memory_space<vmem>>, vector<8x16xf32>
    %1 = arith.truncf %0 : vector<8x16xf32> to vector<8x16xbf16>
    %c0_1 = arith.constant 0 : index
    %c0_2 = arith.constant 0 : index
    %2 = vector.load %arg2[%c0_1, %c0_2] : memref<16x256xbf16, #tpu.memory_space<vmem>>, vector<16x256xbf16>
    %cst = arith.constant dense<0.000000e+00> : vector<8x256xf32>
    %3 = tpu.matmul %1, %2, %cst {dimension_numbers = #tpu.dot_dimension_numbers<[1], [0], [0], [1], [0, 0, 1, 1], [], []>} : vector<8x16xbf16>, vector<16x256xbf16>, vector<8x256xf32> -> vector<8x256xf32>
    %c0_3 = arith.constant 0 : index
    %c0_4 = arith.constant 0 : index
    %4 = vector.load %arg4[%c0_3, %c0_4] : memref<8x32xf32, #tpu.memory_space<vmem>>, vector<8x32xf32>
    %5 = arith.truncf %4 : vector<8x32xf32> to vector<8x32xbf16>
    %c0_5 = arith.constant 0 : index
    %c0_6 = arith.constant 0 : index
    %6 = vector.load %arg6[%c0_5, %c0_6] : memref<32x256xbf16, #tpu.memory_space<vmem>>, vector<32x256xbf16>
    %cst_7 = arith.constant dense<0.000000e+00> : vector<8x256xf32>
    %7 = tpu.matmul %5, %6, %cst_7 {dimension_numbers = #tpu.dot_dimension_numbers<[1], [0], [0], [1], [0, 0, 1, 1], [], []>} : vector<8x32xbf16>, vector<32x256xbf16>, vector<8x256xf32> -> vector<8x256xf32>
    %8 = arith.addf %3, %7 : vector<8x256xf32>
    %c0_8 = arith.constant 0 : index
    %c0_9 = arith.constant 0 : index
    %9 = vector.load %arg5[%c0_8, %c0_9] : memref<8x32xf32, #tpu.memory_space<vmem>>, vector<8x32xf32>
    %10 = arith.truncf %9 : vector<8x32xf32> to vector<8x32xbf16>
    %c0_10 = arith.constant 0 : index
    %c0_11 = arith.constant 0 : index
    %11 = vector.load %arg7[%c0_10, %c0_11] : memref<32x256xbf16, #tpu.memory_space<vmem>>, vector<32x256xbf16>
    %cst_12 = arith.constant dense<0.000000e+00> : vector<8x256xf32>
    %12 = tpu.matmul %10, %11, %cst_12 {dimension_numbers = #tpu.dot_dimension_numbers<[1], [0], [0], [1], [0, 0, 1, 1], [], []>} : vector<8x32xbf16>, vector<32x256xbf16>, vector<8x256xf32> -> vector<8x256xf32>
    %13 = arith.addf %8, %12 : vector<8x256xf32>
    %c0_13 = arith.constant 0 : index
    %c0_14 = arith.constant 0 : index
    %14 = vector.load %arg3[%c0_13, %c0_14] : memref<1x256xf32, #tpu.memory_space<vmem>>, vector<1x256xf32>
    %15 = vector.broadcast %14 : vector<1x256xf32> to vector<8x256xf32>
    %16 = arith.addf %13, %15 : vector<8x256xf32>
    %17 = vector.extract_strided_slice %16 {offsets = [0, 0], sizes = [8, 192], strides = [1, 1]} : vector<8x256xf32> to vector<8x192xf32>
    %18 = arith.negf %17 : vector<8x192xf32>
    %19 = math.exp %18 : vector<8x192xf32>
    %cst_15 = arith.constant 1.000000e+00 : f32
    %20 = vector.broadcast %cst_15 : f32 to vector<8x192xf32>
    %21 = arith.addf %20, %19 : vector<8x192xf32>
    %22 = arith.divf %20, %21 : vector<8x192xf32>
    %23 = vector.extract_strided_slice %22 {offsets = [0, 0], sizes = [8, 64], strides = [1, 1]} : vector<8x192xf32> to vector<8x64xf32>
    %24 = vector.extract_strided_slice %22 {offsets = [0, 64], sizes = [8, 64], strides = [1, 1]} : vector<8x192xf32> to vector<8x64xf32>
    %25 = vector.extract_strided_slice %22 {offsets = [0, 128], sizes = [8, 64], strides = [1, 1]} : vector<8x192xf32> to vector<8x64xf32>
    %26 = vector.extract_strided_slice %16 {offsets = [0, 192], sizes = [8, 64], strides = [1, 1]} : vector<8x256xf32> to vector<8x64xf32>
    %27 = math.tanh %26 : vector<8x64xf32>
    %c0_16 = arith.constant 0 : index
    %c0_17 = arith.constant 0 : index
    %28 = vector.load %arg8[%c0_16, %c0_17] : memref<8x64xf32, #tpu.memory_space<vmem>>, vector<8x64xf32>
    %29 = arith.mulf %23, %28 : vector<8x64xf32>
    %30 = arith.mulf %24, %27 : vector<8x64xf32>
    %31 = arith.addf %29, %30 : vector<8x64xf32>
    %32 = math.tanh %31 : vector<8x64xf32>
    %33 = arith.mulf %25, %32 : vector<8x64xf32>
    %34 = tpu.concatenate %33, %31 in 1 : vector<8x64xf32>, vector<8x64xf32> -> vector<8x128xf32>
    %c0_18 = arith.constant 0 : index
    %c0_19 = arith.constant 0 : index
    %35 = vector.load %arg9[%c0_18, %c0_19] : memref<8x128xf32, #tpu.memory_space<vmem>>, vector<8x128xf32>
    tpu.vector_store %arg9[%c0_18, %c0_19], %34 {strides = array<i32>} : memref<8x128xf32, #tpu.memory_space<vmem>>, vector<8x128xf32>,
    return
  }
  func.func @transform_0(%arg0: i32) -> (i32, i32) {
    %c0_i32 = arith.constant 0 : i32
    %c0_i32_0 = arith.constant 0 : i32
    return %arg0, %c0_i32 : i32, i32
  }
  func.func @transform_1(%arg0: i32) -> (i32, i32) {
    %c0_i32 = arith.constant 0 : i32
    %c0_i32_0 = arith.constant 0 : i32
    %c0_i32_1 = arith.constant 0 : i32
    return %c0_i32, %c0_i32_0 : i32, i32
  }
  func.func @transform_2(%arg0: i32) -> (i32, i32) {
    %c0_i32 = arith.constant 0 : i32
    %c0_i32_0 = arith.constant 0 : i32
    %c0_i32_1 = arith.constant 0 : i32
    return %c0_i32, %c0_i32_0 : i32, i32
  }
  func.func @transform_3(%arg0: i32) -> (i32, i32) {
    %c0_i32 = arith.constant 0 : i32
    %c0_i32_0 = arith.constant 0 : i32
    return %arg0, %c0_i32 : i32, i32
  }
  func.func @transform_4(%arg0: i32) -> (i32, i32) {
    %c0_i32 = arith.constant 0 : i32
    %c0_i32_0 = arith.constant 0 : i32
    return %arg0, %c0_i32 : i32, i32
  }
  func.func @transform_5(%arg0: i32) -> (i32, i32) {
    %c0_i32 = arith.constant 0 : i32
    %c0_i32_0 = arith.constant 0 : i32
    %c0_i32_1 = arith.constant 0 : i32
    return %c0_i32, %c0_i32_0 : i32, i32
  }
  func.func @transform_6(%arg0: i32) -> (i32, i32) {
    %c0_i32 = arith.constant 0 : i32
    %c0_i32_0 = arith.constant 0 : i32
    %c0_i32_1 = arith.constant 0 : i32
    return %c0_i32, %c0_i32_0 : i32, i32
  }
  func.func @transform_7(%arg0: i32) -> (i32, i32) {
    %c0_i32 = arith.constant 0 : i32
    %c0_i32_0 = arith.constant 0 : i32
    return %arg0, %c0_i32 : i32, i32
  }
  func.func @transform_8(%arg0: i32) -> (i32, i32) {
    %c0_i32 = arith.constant 0 : i32
    %c0_i32_0 = arith.constant 0 : i32
    return %arg0, %c0_i32 : i32, i32
  }
}

</mosaic_0001>

<llo_original>
// kernel: tpu_custom_call.1
$region0: #{tpu_custom_call.1}
  #allocation0 [shape = 'u32[]', space=smem, size = 0x4, offset = 0x4, fixed_abs, tag = 'smem constant byte address 0x4 - core index']
  #allocation1 [shape = 'u32[144,128]{1,0:T(1,128)}', space=vmem, size = 0x12000, scoped, tag = 'internal scratch']
  %s0 = inlined_call_operand.hbm [shape: f32[8,16], index: 0, kind: input, shape index: {}]
  %s1 = inlined_call_operand.hbm [shape: bf16[16,256], index: 1, kind: input, shape index: {}]
  %s2 = inlined_call_operand.vmem [shape: f32[1,256], index: 2, kind: input, shape index: {}]
  %s3 = inlined_call_operand.vmem [shape: f32[8,32], index: 3, kind: input, shape index: {}]
  %s4 = inlined_call_operand.hbm [shape: f32[8,32], index: 4, kind: input, shape index: {}]
  %s5 = inlined_call_operand.hbm [shape: bf16[32,256], index: 5, kind: input, shape index: {}]
  %s6 = inlined_call_operand.hbm [shape: bf16[32,256], index: 6, kind: input, shape index: {}]
  %s7 = inlined_call_operand.vmem [shape: f32[8,64], index: 7, kind: input, shape index: {}]
  %s8 = inlined_call_operand.hbm [shape: f32[8,128], index: 8, kind: output, shape index: {}]
  %s9 = sld [smem:[#allocation0]]
  $region62: #{tpu_custom_call.1} parent=0
    _
  %s11 = ssub.s32 1, %s9
  %s12 = scalar_select 0, %s11, %s9
  $region1: #{tpu_custom_call.1} parent=0
    #allocation2 [shape = 'u8[4096]{0}', space=vmem, size = 0x1000, scoped, tag = 'input window, operand 0, single buffered']
    #allocation3 [shape = 's32[1]{0}', space=sflag, size = 0x4, scoped, tag = 'scoped memory for tpu_custom_call.1']
    #allocation4 [shape = 's32[1]{0}', space=sflag, size = 0x4, scoped, tag = 'scoped memory for tpu_custom_call.1']
    #allocation5 [shape = 'u8[8192]{0}', space=vmem, size = 0x2000, scoped, tag = 'input window, operand 1, single buffered']
    #allocation6 [shape = 's32[1]{0}', space=sflag, size = 0x4, scoped, tag = 'scoped memory for tpu_custom_call.1']
    #allocation7 [shape = 'u8[4096]{0}', space=vmem, size = 0x1000, scoped, tag = 'input window, operand 4, single buffered']
    #allocation8 [shape = 'u8[16384]{0}', space=vmem, size = 0x4000, scoped, tag = 'input window, operand 5, single buffered']
    #allocation9 [shape = 's32[1]{0}', space=sflag, size = 0x4, scoped, tag = 'scoped memory for tpu_custom_call.1']
    #allocation10 [shape = 'u8[16384]{0}', space=vmem, size = 0x4000, scoped, tag = 'input window, operand 6, single buffered']
    #allocation11 [shape = 'u8[4096]{0}', space=vmem, size = 0x1000, scoped, tag = 'output window, operand 0, single buffered']
    %13 = vsyncpa [#allocation3], 0
    %14 = vsyncpa [#allocation6], 0
    %15 = vsyncpa [#allocation9], 0
    %16 = vsyncpa [#allocation4], 0
    // Predicated region
    $region2: #{tpu_custom_call.1} parent=1 // pred_check
      _
    $region3: #{tpu_custom_call.1} parent=1 // pred_check_branch
      %18 = sbr.rel (0) target = $region5
    $region4: #{tpu_custom_call.1} parent=1 // pred_region
      %s20 = ssub.s32 128, 128
      %21 = vsyncadd [#allocation3], %s20
      %s23 = sshll.u32 [#allocation2], 4
      %s24 = int_to_ptr.vmem [resolvable:$true] %s23
      %26 = dma.hbm_to_vmem [thread:$0]  %s0, 128, %s24, [#allocation3]
    $region5: #{tpu_custom_call.1} parent=1 // pred_fallthru
      _
    // Predicated region
    $region6: #{tpu_custom_call.1} parent=1 // pred_check
      _
    $region7: #{tpu_custom_call.1} parent=1 // pred_check_branch
      %28 = sbr.rel (0) target = $region9
    $region8: #{tpu_custom_call.1} parent=1 // pred_region
      %s30 = ssub.s32 256, 256
      %31 = vsyncadd [#allocation6], %s30
      %s32 = sshll.u32 [#allocation5], 4
      %s33 = int_to_ptr.vmem [resolvable:$true] %s32
      %38 = dma.hbm_to_vmem [thread:$0]  %s1, 256, %s33, [#allocation6], 128, 128, 8
    $region9: #{tpu_custom_call.1} parent=1 // pred_fallthru
      _
    // Predicated region
    $region10: #{tpu_custom_call.1} parent=1 // pred_check
      _
    $region11: #{tpu_custom_call.1} parent=1 // pred_check_branch
      %40 = sbr.rel (0) target = $region13
    $region12: #{tpu_custom_call.1} parent=1 // pred_region
      _
    $region13: #{tpu_custom_call.1} parent=1 // pred_fallthru
      _
    // Predicated region
    $region14: #{tpu_custom_call.1} parent=1 // pred_check
      _
    $region15: #{tpu_custom_call.1} parent=1 // pred_check_branch
      %42 = sbr.rel (0) target = $region17
    $region16: #{tpu_custom_call.1} parent=1 // pred_region
      _
    $region17: #{tpu_custom_call.1} parent=1 // pred_fallthru
      _
    // Predicated region
    $region18: #{tpu_custom_call.1} parent=1 // pred_check
      _
    $region19: #{tpu_custom_call.1} parent=1 // pred_check_branch
      %44 = sbr.rel (0) target = $region21
    $region20: #{tpu_custom_call.1} parent=1 // pred_region
      %s46 = ssub.s32 128, 128
      %47 = vsyncadd [#allocation6], %s46
      %s49 = sshll.u32 [#allocation7], 4
      %s50 = int_to_ptr.vmem [resolvable:$true] %s49
      %52 = dma.hbm_to_vmem [thread:$0]  %s4, 128, %s50, [#allocation6]
    $region21: #{tpu_custom_call.1} parent=1 // pred_fallthru
      _
    // Predicated region
    $region22: #{tpu_custom_call.1} parent=1 // pred_check
      _
    $region23: #{tpu_custom_call.1} parent=1 // pred_check_branch
      %54 = sbr.rel (0) target = $region25
    $region24: #{tpu_custom_call.1} parent=1 // pred_region
      %s56 = ssub.s32 512, 512
      %57 = vsyncadd [#allocation9], %s56
      %s58 = sshll.u32 [#allocation8], 4
      %s59 = int_to_ptr.vmem [resolvable:$true] %s58
      %64 = dma.hbm_to_vmem [thread:$0]  %s5, 512, %s59, [#allocation9], 128, 128, 8
    $region25: #{tpu_custom_call.1} parent=1 // pred_fallthru
      _
    // Predicated region
    $region26: #{tpu_custom_call.1} parent=1 // pred_check
      _
    $region27: #{tpu_custom_call.1} parent=1 // pred_check_branch
      %66 = sbr.rel (0) target = $region29
    $region28: #{tpu_custom_call.1} parent=1 // pred_region
      %s68 = ssub.s32 512, 512
      %69 = vsyncadd [#allocation9], %s68
      %s70 = sshll.u32 [#allocation10], 4
      %s71 = int_to_ptr.vmem [resolvable:$true] %s70
      %76 = dma.hbm_to_vmem [thread:$0]  %s6, 512, %s71, [#allocation9], 128, 128, 8
    $region29: #{tpu_custom_call.1} parent=1 // pred_fallthru
      _
    // Predicated region
    $region30: #{tpu_custom_call.1} parent=1 // pred_check
      _
    $region31: #{tpu_custom_call.1} parent=1 // pred_check_branch
      %78 = sbr.rel (0) target = $region33
    $region32: #{tpu_custom_call.1} parent=1 // pred_region
      _
    $region33: #{tpu_custom_call.1} parent=1 // pred_fallthru
      _
    // Predicated region
    $region34: #{tpu_custom_call.1} parent=1 // pred_check
      _
    $region35: #{tpu_custom_call.1} parent=1 // pred_check_branch
      %80 = sbr.rel (0) target = $region37
    $region36: #{tpu_custom_call.1} parent=1 // pred_region
      %81 = dma.done [#allocation3], 128
    $region37: #{tpu_custom_call.1} parent=1 // pred_fallthru
      _
    // Predicated region
    $region38: #{tpu_custom_call.1} parent=1 // pred_check
      _
    $region39: #{tpu_custom_call.1} parent=1 // pred_check_branch
      %83 = sbr.rel (0) target = $region41
    $region40: #{tpu_custom_call.1} parent=1 // pred_region
      %84 = dma.done [#allocation6], 256
    $region41: #{tpu_custom_call.1} parent=1 // pred_fallthru
      _
    // Predicated region
    $region42: #{tpu_custom_call.1} parent=1 // pred_check
      _
    $region43: #{tpu_custom_call.1} parent=1 // pred_check_branch
      %86 = sbr.rel (0) target = $region45
    $region44: #{tpu_custom_call.1} parent=1 // pred_region
      %87 = dma.done [#allocation6], 128
    $region45: #{tpu_custom_call.1} parent=1 // pred_fallthru
      _
    // Predicated region
    $region46: #{tpu_custom_call.1} parent=1 // pred_check
      _
    $region47: #{tpu_custom_call.1} parent=1 // pred_check_branch
      %89 = sbr.rel (0) target = $region49
    $region48: #{tpu_custom_call.1} parent=1 // pred_region
      %90 = dma.done [#allocation9], 512
    $region49: #{tpu_custom_call.1} parent=1 // pred_fallthru
      _
    // Predicated region
    $region50: #{tpu_custom_call.1} parent=1 // pred_check
      _
    $region51: #{tpu_custom_call.1} parent=1 // pred_check_branch
      %92 = sbr.rel (0) target = $region53
    $region52: #{tpu_custom_call.1} parent=1 // pred_region
      %93 = dma.done [#allocation9], 512
    $region53: #{tpu_custom_call.1} parent=1 // pred_fallthru
      _
    %v95 = vld [vmem:[#allocation2] sm:$0xff]
    %v96 = vpack.c.bf16 %v95, %v95
    %v97 = vld [vmem:[#allocation5] sm:$0xff]
    %v98 = vld [vmem:[#allocation5 + $0x8] sm:$0xff]
    %v99 = vld [vmem:[%s3] sm:$0xff]
    %v100 = vpack.c.bf16 %v99, %v99
    %v101 = vld [vmem:[#allocation8] sm:$0xff]
    %v102 = vld [vmem:[#allocation8 + $0x8] sm:$0xff]
    %v103 = vld [vmem:[#allocation8 + $0x10] sm:$0xff]
    %v104 = vld [vmem:[#allocation8 + $0x18] sm:$0xff]
    %v109 = vunpack.c.l.b16 %v101
    %v110 = vunpack.c.h.b16 %v101
    %v111 = vunpack.c.l.b16 %v102
    %v112 = vunpack.c.h.b16 %v102
    %v113 = vunpack.c.l.b16 %v103
    %v114 = vunpack.c.h.b16 %v103
    %v115 = vunpack.c.l.b16 %v104
    %v116 = vunpack.c.h.b16 %v104
    %v117 = vpack.c.b16 %v111, %v109
    %v118 = vpack.c.b16 %v112, %v110
    %v119 = vpack.c.b16 %v115, %v113
    %v120 = vpack.c.b16 %v116, %v114
    %vm125 = vcmask 261120
    %v127 = vsel %vm125, %v100, 0
    %129 = vmatprep.subr.bf16.mxu0 %v118
    %130 = vmatpush1.bf16.msra.mxu0 %v117
    %131 = vmatprep.subr.bf16.mxu0 %v120
    %132 = vmatpush1.bf16.msra.mxu0 %v119
    %133 = vmatprep.subr.bf16.mxu0 0
    %134 = vmatpush1.bf16.msra.mxu0 0
    %135 = vmatprep.subr.bf16.mxu0 0
    %136 = vmatpush1.bf16.msra.mxu0 0
    %137 = vmatprep.subr.bf16.mxu0 0
    %138 = vmatpush1.bf16.msra.mxu0 0
    %139 = vmatprep.subr.bf16.mxu0 0
    %140 = vmatpush1.bf16.msra.mxu0 0
    %141 = vmatprep.subr.bf16.mxu0 0
    %142 = vmatpush1.bf16.msra.mxu0 0
    %143 = vmatprep.subr.bf16.mxu0 0
    %144 = vmatpush1.bf16.msra.mxu0 0
    %145 = vmatprep.subr.bf16.mxu0 0
    %146 = vmatpush1.bf16.msra.mxu0 0
    %147 = vmatprep.subr.bf16.mxu0 0
    %148 = vmatpush1.bf16.msra.mxu0 0
    %149 = vmatprep.subr.bf16.mxu0 0
    %150 = vmatpush1.bf16.msra.mxu0 0
    %151 = vmatprep.subr.bf16.mxu0 0
    %152 = vmatpush1.bf16.msra.mxu0 0
    %153 = vmatprep.subr.bf16.mxu0 0
    %154 = vmatpush1.bf16.msra.mxu0 0
    %155 = vmatprep.subr.bf16.mxu0 0
    %156 = vmatpush1.bf16.msra.mxu0 0
    %157 = vmatprep.subr.bf16.mxu0 0
    %158 = vmatpush1.bf16.msra.mxu0 0
    %159 = vmatprep.subr.bf16.mxu0 0
    %160 = vmatpush1.bf16.msra.mxu0 0
    %161 = vmatprep.mubr.bf16.mxu0 0
    %162 = vmatmul.mubr.bf16.gmra.mrb[0].mxu0 %v127
    %v163 = vpop.f32.mrb[0].mxu0
    %v164 = vadd.f32 0.0, %v163
    %v165 = vpop.f32.mrb[0].mxu0
    %v166 = vadd.f32 0.0, %v165
    %v167 = vpop.f32.mrb[0].mxu0
    %v168 = vpop.f32.mrb[0].mxu0
    %169 = vdwg.mxu0
    %v172 = vunpack.c.l.b16 %v97
    %v173 = vunpack.c.h.b16 %v97
    %v174 = vunpack.c.l.b16 %v98
    %v175 = vunpack.c.h.b16 %v98
    %v176 = vpack.c.b16 %v174, %v172
    %v177 = vpack.c.b16 %v175, %v173
    %vm180 = vcmask 130048
    %v182 = vsel %vm180, %v96, 0
    %184 = vmatprep.subr.bf16.mxu0 %v177
    %185 = vmatpush1.bf16.msra.mxu0 %v176
    %186 = vmatprep.subr.bf16.mxu0 0
    %187 = vmatpush1.bf16.msra.mxu0 0
    %188 = vmatprep.subr.bf16.mxu0 0
    %189 = vmatpush1.bf16.msra.mxu0 0
    %190 = vmatprep.subr.bf16.mxu0 0
    %191 = vmatpush1.bf16.msra.mxu0 0
    %192 = vmatprep.subr.bf16.mxu0 0
    %193 = vmatpush1.bf16.msra.mxu0 0
    %194 = vmatprep.subr.bf16.mxu0 0
    %195 = vmatpush1.bf16.msra.mxu0 0
    %196 = vmatprep.subr.bf16.mxu0 0
    %197 = vmatpush1.bf16.msra.mxu0 0
    %198 = vmatprep.subr.bf16.mxu0 0
    %199 = vmatpush1.bf16.msra.mxu0 0
    %200 = vmatprep.subr.bf16.mxu0 0
    %201 = vmatpush1.bf16.msra.mxu0 0
    %202 = vmatprep.subr.bf16.mxu0 0
    %203 = vmatpush1.bf16.msra.mxu0 0
    %204 = vmatprep.subr.bf16.mxu0 0
    %205 = vmatpush1.bf16.msra.mxu0 0
    %206 = vmatprep.subr.bf16.mxu0 0
    %207 = vmatpush1.bf16.msra.mxu0 0
    %208 = vmatprep.subr.bf16.mxu0 0
    %209 = vmatpush1.bf16.msra.mxu0 0
    %210 = vmatprep.subr.bf16.mxu0 0
    %211 = vmatpush1.bf16.msra.mxu0 0
    %212 = vmatprep.subr.bf16.mxu0 0
    %213 = vmatpush1.bf16.msra.mxu0 0
    %214 = vmatprep.subr.bf16.mxu0 0
    %215 = vmatpush1.bf16.msra.mxu0 0
    %216 = vmatprep.mubr.bf16.mxu0 0
    %217 = vmatmul.mubr.bf16.gmra.mrb[0].mxu0 %v182
    %v218 = vpop.f32.mrb[0].mxu0
    %v219 = vadd.f32 %v164, %v218
    %v220 = vpop.f32.mrb[0].mxu0
    %v221 = vadd.f32 %v166, %v220
    %v222 = vpop.f32.mrb[0].mxu0
    %v223 = vpop.f32.mrb[0].mxu0
    %224 = vdwg.mxu0
    %v225 = vld [vmem:[#allocation7] sm:$0xff]
    %v226 = vpack.c.bf16 %v225, %v225
    %v227 = vld [vmem:[#allocation10] sm:$0xff]
    %v228 = vld [vmem:[#allocation10 + $0x8] sm:$0xff]
    %v229 = vld [vmem:[#allocation10 + $0x10] sm:$0xff]
    %v230 = vld [vmem:[#allocation10 + $0x18] sm:$0xff]
    %v235 = vunpack.c.l.b16 %v227
    %v236 = vunpack.c.h.b16 %v227
    %v237 = vunpack.c.l.b16 %v228
    %v238 = vunpack.c.h.b16 %v228
    %v239 = vunpack.c.l.b16 %v229
    %v240 = vunpack.c.h.b16 %v229
    %v241 = vunpack.c.l.b16 %v230
    %v242 = vunpack.c.h.b16 %v230
    %v243 = vpack.c.b16 %v237, %v235
    %v244 = vpack.c.b16 %v238, %v236
    %v245 = vpack.c.b16 %v241, %v239
    %v246 = vpack.c.b16 %v242, %v240
    %v252 = vsel %vm125, %v226, 0
    %254 = vmatprep.subr.bf16.mxu0 %v244
    %255 = vmatpush1.bf16.msra.mxu0 %v243
    %256 = vmatprep.subr.bf16.mxu0 %v246
    %257 = vmatpush1.bf16.msra.mxu0 %v245
    %258 = vmatprep.subr.bf16.mxu0 0
    %259 = vmatpush1.bf16.msra.mxu0 0
    %260 = vmatprep.subr.bf16.mxu0 0
    %261 = vmatpush1.bf16.msra.mxu0 0
    %262 = vmatprep.subr.bf16.mxu0 0
    %263 = vmatpush1.bf16.msra.mxu0 0
    %264 = vmatprep.subr.bf16.mxu0 0
    %265 = vmatpush1.bf16.msra.mxu0 0
    %266 = vmatprep.subr.bf16.mxu0 0
    %267 = vmatpush1.bf16.msra.mxu0 0
    %268 = vmatprep.subr.bf16.mxu0 0
    %269 = vmatpush1.bf16.msra.mxu0 0
    %270 = vmatprep.subr.bf16.mxu0 0
    %271 = vmatpush1.bf16.msra.mxu0 0
    %272 = vmatprep.subr.bf16.mxu0 0
    %273 = vmatpush1.bf16.msra.mxu0 0
    %274 = vmatprep.subr.bf16.mxu0 0
    %275 = vmatpush1.bf16.msra.mxu0 0
    %276 = vmatprep.subr.bf16.mxu0 0
    %277 = vmatpush1.bf16.msra.mxu0 0
    %278 = vmatprep.subr.bf16.mxu0 0
    %279 = vmatpush1.bf16.msra.mxu0 0
    %280 = vmatprep.subr.bf16.mxu0 0
    %281 = vmatpush1.bf16.msra.mxu0 0
    %282 = vmatprep.subr.bf16.mxu0 0
    %283 = vmatpush1.bf16.msra.mxu0 0
    %284 = vmatprep.subr.bf16.mxu0 0
    %285 = vmatpush1.bf16.msra.mxu0 0
    %286 = vmatprep.mubr.bf16.mxu0 0
    %287 = vmatmul.mubr.bf16.gmra.mrb[0].mxu0 %v252
    %v288 = vpop.f32.mrb[0].mxu0
    %v289 = vadd.f32 0.0, %v288
    %v290 = vpop.f32.mrb[0].mxu0
    %v291 = vadd.f32 0.0, %v290
    %v292 = vpop.f32.mrb[0].mxu0
    %v293 = vpop.f32.mrb[0].mxu0
    %294 = vdwg.mxu0
    %v295 = vadd.f32 %v219, %v289
    %v296 = vadd.f32 %v221, %v291
    %v297 = vld [vmem:[%s2] sm:$0x3]
    %v299 = vlaneseq
    %v300 = vshrl.u32 %v299, 7
    %v301 = vsub.s32 0, %v300
    %v302 = vrot.slane %v297, %v301
    %v303 = vlaneseq
    %v304 = vshrl.u32 %v303, 7
    %v305 = vsub.s32 1, %v304
    %v306 = vrot.slane %v297, %v305
    %v309 = vadd.f32 %v295, %v302
    %v310 = vadd.f32 %v296, %v306
    %v311 = vxor.u32 %v309, 2147483648
    %v312 = vxor.u32 %v310, 2147483648
    %v313 = vmul.f32 %v311, 1.442695
    %v314 = vpow.pop %v313
    %v315 = vmul.f32 %v312, 1.442695
    %v316 = vpow.pop %v315
    %v317 = vadd.f32 %v314, 1.0
    %v318 = vadd.f32 %v316, 1.0
    %v319 = vrcp.pop %v317
    %v320 = vmul.f32 1.0, %v319
    %v321 = vrcp.pop %v318
    %v322 = vmul.f32 1.0, %v321
    %v323 = vtanh.pop %v310
    %v324 = vld [vmem:[%s7] sm:$0xff]
    %v325 = vmul.f32 %v320, %v324
    %v326 = vmul.f32 %v320, %v323
    %328 = vrot.lane.b32.xlu0 %v326, 64
    %v329 = vpop.permute.xlu0 %328
    %v331 = vadd.f32 %v325, %v329
    %v332 = vtanh.pop %v331
    %v333 = vmul.f32 %v322, %v332
    %335 = vrot.lane.b32.xlu0 %v331, 64
    %v336 = vpop.permute.xlu0 %335
    %vm338 = vcmask 523264
    %v339 = vsel %vm338, %v333, %v336
    %340 = vst [vmem:[#allocation11] sm:$0xff] %v339
    // Predicated region
    $region54: #{tpu_custom_call.1} parent=1 // pred_check
      _
    $region55: #{tpu_custom_call.1} parent=1 // pred_check_branch
      %342 = sbr.rel (0) target = $region57
    $region56: #{tpu_custom_call.1} parent=1 // pred_region
      %s344 = ssub.s32 128, 128
      %345 = vsyncadd [#allocation4], %s344
      %s347 = sshll.u32 [#allocation11], 4
      %s348 = int_to_ptr.vmem [resolvable:$true] %s347
      %350 = dma.vmem_to_hbm [thread:$0]  %s348, 128, %s8, [#allocation4]
    $region57: #{tpu_custom_call.1} parent=1 // pred_fallthru
      _
    // Predicated region
    $region58: #{tpu_custom_call.1} parent=1 // pred_check
      _
    $region59: #{tpu_custom_call.1} parent=1 // pred_check_branch
      %352 = sbr.rel (0) target = $region61
    $region60: #{tpu_custom_call.1} parent=1 // pred_region
      %353 = dma.done [#allocation4], 128
    $region61: #{tpu_custom_call.1} parent=1 // pred_fallthru
      _
    %354 = vsyncpa [#allocation3], 1
    %355 = vsyncpa [#allocation6], 1
    %356 = vsyncpa [#allocation9], 1
    %357 = vsyncpa [#allocation4], 1

</llo_original>
